<compile_context>
chip_gen: v7x
topology: tpu7x:2x2x1
jax: 0.10.0
libtpu: 0.0.40
codegen_flags: <defaults>
</compile_context>

<pallas_src>
import jax
import jax.numpy as jnp
from jax.experimental import pallas as pl
from jax.experimental.pallas import tpu as pltpu

_LEAKY_SLOPE = 0.01


def _leaky_relu(x, slope=_LEAKY_SLOPE):
    # max(x, slope*x) == LeakyReLU for 0 < slope < 1 (2 VALU ops, no select).
    return jnp.maximum(x, slope * x)


def _round_up(x, m):
    return ((x + m - 1) // m) * m


def q_kernel(obs_ref, act_ref, w1_ref, b1_ref, w2_ref, b2_ref, wq_ref, bq_ref,
             out_ref):
    # Fused torch.cat: lane-concat the obs / action tiles, feed the MXU bf16.
    x = jnp.concatenate([obs_ref[...], act_ref[...]], axis=-1)
    x = x.astype(jnp.bfloat16)

    # fc1 + LeakyReLU (bf16 MXU, f32 accumulate, f32 elementwise).
    h1 = jnp.dot(x, w1_ref[...], preferred_element_type=jnp.float32) + b1_ref[...]
    h1 = _leaky_relu(h1)

    # fc2 + LeakyReLU.
    phi = (jnp.dot(h1.astype(jnp.bfloat16), w2_ref[...],
                   preferred_element_type=jnp.float32) + b2_ref[...])
    phi = _leaky_relu(phi)

    # q head with the L2 normalization fused in:  q = <phi,wq>/||phi|| + bq.
    # Lane reductions land on XLU, rsqrt on EUP; no normalized phi materialized.
    dot_q = jnp.sum(phi * wq_ref[...], axis=-1, keepdims=True)
    norm_sq = jnp.sum(phi * phi, axis=-1, keepdims=True)
    norm_sq = jnp.maximum(norm_sq, jnp.finfo(jnp.float32).tiny)  # padded-row guard
    out_ref[...] = dot_q * jax.lax.rsqrt(norm_sq) + bq_ref[0, 0]


def q_forward(obs, action, params, *, tile_b=1024, vmem_limit_bytes=48 * 1024 * 1024):
    """Q(obs, action) -> (B,) as a single batch-tiled Pallas kernel."""
    obs = obs.astype(jnp.float32)
    action = action.astype(jnp.float32)
    B, obs_dim = obs.shape
    action_dim = action.shape[-1]
    in_dim, n_hid = params["w1"].shape
    assert in_dim == obs_dim + action_dim

    # >= 2 grid steps whenever B > 8 so the "parallel" axis shards over both
    # TensorCores on v7x (harmless extra step on single-TC v5e/v6e).
    tb = min(_round_up(tile_b, 8), max(8, _round_up(pl.cdiv(B, 2), 8)))
    grid = (pl.cdiv(B, tb),)

    def _tile(shape):          # batch-tiled operand
        return pl.BlockSpec(shape, lambda i: (i, 0))

    def _resident(shape):      # whole-array operand, DMA'd once, stays in VMEM
        return pl.BlockSpec(shape, lambda i: (0, 0))

    out = pl.pallas_call(
        q_kernel,
        out_shape=jax.ShapeDtypeStruct((B, 1), jnp.float32),
        grid=grid,
        in_specs=[
            _tile((tb, obs_dim)),
            _tile((tb, action_dim)),
            _resident((in_dim, n_hid)),          # W1 (bf16)
            _resident((1, n_hid)),               # b1 (f32)
            _resident((n_hid, n_hid)),           # W2 (bf16)
            _resident((1, n_hid)),               # b2 (f32)
            _resident((1, n_hid)),               # wq row (f32, VPU q-head)
            pl.BlockSpec(memory_space=pltpu.MemorySpace.SMEM),   # bq scalar
        ],
        out_specs=_tile((tb, 1)),
        compiler_params=pltpu.CompilerParams(
            dimension_semantics=("parallel",),
            vmem_limit_bytes=vmem_limit_bytes),
    )(obs, action,
      params["w1"], params["b1"], params["w2"], params["b2"],
      params["wq_row"], params["bq"])
    return out.reshape(-1)


def init_params(key, obs_dim, action_dim, n_hid):
    """Orthogonal weights / zero biases (PyTorch orthogonal_weight_init convention).

    Weights are stored transposed relative to nn.Linear ((in, out)); W1/W2 are
    stored in bf16 (MXU-native, halves resident-weight VMEM and weight DMA),
    biases and the tiny q-head row stay f32 for the f32 VPU path.
    """
    k1, k2, k3 = jax.random.split(key, 3)
    ortho = jax.nn.initializers.orthogonal()
    in_dim = obs_dim + action_dim
    w1 = ortho(k1, (in_dim, n_hid), jnp.float32)
    w2 = ortho(k2, (n_hid, n_hid), jnp.float32)
    wq = ortho(k3, (n_hid, 1), jnp.float32)
    return {
        "w1": w1.astype(jnp.bfloat16),
        "b1": jnp.zeros((1, n_hid), jnp.float32),
        "w2": w2.astype(jnp.bfloat16),
        "b2": jnp.zeros((1, n_hid), jnp.float32),
        "wq_row": wq.reshape(1, n_hid),
        "bq": jnp.zeros((1, 1), jnp.float32),
    }


def q_forward_ref(obs, action, params, *, mxu_bf16=True):
    """Pure-JAX reference mirroring the PyTorch module.

    mxu_bf16=True mirrors the kernel's bf16-matmul / f32-accumulate precision;
    mxu_bf16=False is the plain f32 semantics of the original module (same
    stored parameter values, upcast).
    """
    mm = jnp.bfloat16 if mxu_bf16 else jnp.float32
    x = jnp.concatenate([obs.astype(jnp.float32), action.astype(jnp.float32)],
                        axis=-1)
    w1 = params["w1"].astype(mm)
    w2 = params["w2"].astype(mm)
    h1 = _leaky_relu(jnp.dot(x.astype(mm), w1,
                             preferred_element_type=jnp.float32) + params["b1"])
    phi = _leaky_relu(jnp.dot(h1.astype(mm), w2,
                              preferred_element_type=jnp.float32) + params["b2"])
    phi = phi / jnp.sqrt(jnp.sum(phi * phi, axis=-1, keepdims=True))
    return (jnp.sum(phi * params["wq_row"], axis=-1) + params["bq"][0, 0]).reshape(-1)


if __name__ == "__main__":
    key = jax.random.PRNGKey(0)
    obs_dim, action_dim, n_hid = 16, 4, 32
    k_obs, k_act, k_par, k_obs2, k_act2 = jax.random.split(key, 5)
    params = init_params(k_par, obs_dim, action_dim, n_hid)

    # Case 1: small batch, single grid step.
    B = 8
    obs = jax.random.normal(k_obs, (B, obs_dim), jnp.float32)
    action = jax.random.normal(k_act, (B, action_dim), jnp.float32)
    q_vals = q_forward(obs, action, params)
    jax.block_until_ready(q_vals)
    assert q_vals.shape == (B,)
    q_mirror = q_forward_ref(obs, action, params, mxu_bf16=True)
    assert jnp.allclose(q_vals, q_mirror, atol=2e-3, rtol=2e-3), \
        float(jnp.max(jnp.abs(q_vals - q_mirror)))
    q_f32 = q_forward_ref(obs, action, params, mxu_bf16=False)
    assert jnp.allclose(q_vals, q_f32, atol=5e-2, rtol=5e-2), \
        float(jnp.max(jnp.abs(q_vals - q_f32)))

    # Case 2: multi-tile grid with a ragged final tile (B not a multiple of TILE_B).
    B2 = 20
    obs2 = jax.random.normal(k_obs2, (B2, obs_dim), jnp.float32)
    act2 = jax.random.normal(k_act2, (B2, action_dim), jnp.float32)
    q2 = q_forward(obs2, act2, params, tile_b=8)
    jax.block_until_ready(q2)
    assert q2.shape == (B2,)
    assert bool(jnp.all(jnp.isfinite(q2)))
    q2_mirror = q_forward_ref(obs2, act2, params, mxu_bf16=True)
    assert jnp.allclose(q2, q2_mirror, atol=2e-3, rtol=2e-3), \
        float(jnp.max(jnp.abs(q2 - q2_mirror)))

    print("KERNEL_OK")
</pallas_src>

<mosaic_0001>
module attributes {stable_mosaic.version = 11 : i64} {
  func.func @q_kernel(%arg0: i32, %arg1: memref<8x16xf32, #tpu.memory_space<vmem>>, %arg2: memref<8x4xf32, #tpu.memory_space<vmem>>, %arg3: memref<20x32xbf16, #tpu.memory_space<vmem>>, %arg4: memref<1x32xf32, #tpu.memory_space<vmem>>, %arg5: memref<32x32xbf16, #tpu.memory_space<vmem>>, %arg6: memref<1x32xf32, #tpu.memory_space<vmem>>, %arg7: memref<1x32xf32, #tpu.memory_space<vmem>>, %arg8: memref<1x1xf32, #tpu.memory_space<smem>>, %arg9: memref<8x1xf32, #tpu.memory_space<vmem>>) attributes {dimension_semantics = [#tpu.dimension_semantics<parallel>], iteration_bounds = array<i64: 1>, scalar_prefetch = 0 : i64, scratch_operands = 0 : i64, tpu.core_type = #tpu.core_type<tc>, window_params = [{transform_indices = @transform_0, window_bounds = array<i64: 8, 16>}, {transform_indices = @transform_1, window_bounds = array<i64: 8, 4>}, {pipeline_mode = #tpu.pipeline_mode<synchronous>, transform_indices = @transform_2, window_bounds = array<i64: 20, 32>}, {pipeline_mode = #tpu.pipeline_mode<synchronous>, transform_indices = @transform_3, window_bounds = array<i64: 1, 32>}, {pipeline_mode = #tpu.pipeline_mode<synchronous>, transform_indices = @transform_4, window_bounds = array<i64: 32, 32>}, {pipeline_mode = #tpu.pipeline_mode<synchronous>, transform_indices = @transform_5, window_bounds = array<i64: 1, 32>}, {pipeline_mode = #tpu.pipeline_mode<synchronous>, transform_indices = @transform_6, window_bounds = array<i64: 1, 32>}, {transform_indices = @transform_7, window_bounds = array<i64: 1, 1>}, {transform_indices = @transform_8, window_bounds = array<i64: 8, 1>}]} {
    %c0 = arith.constant 0 : index
    %c0_0 = arith.constant 0 : index
    %0 = vector.load %arg1[%c0, %c0_0] : memref<8x16xf32, #tpu.memory_space<vmem>>, vector<8x16xf32>
    %c0_1 = arith.constant 0 : index
    %c0_2 = arith.constant 0 : index
    %1 = vector.load %arg2[%c0_1, %c0_2] : memref<8x4xf32, #tpu.memory_space<vmem>>, vector<8x4xf32>
    %2 = tpu.concatenate %0, %1 in 1 : vector<8x16xf32>, vector<8x4xf32> -> vector<8x20xf32>
    %3 = arith.truncf %2 : vector<8x20xf32> to vector<8x20xbf16>
    %c0_3 = arith.constant 0 : index
    %c0_4 = arith.constant 0 : index
    %4 = vector.load %arg3[%c0_3, %c0_4] : memref<20x32xbf16, #tpu.memory_space<vmem>>, vector<20x32xbf16>
    %cst = arith.constant dense<0.000000e+00> : vector<8x32xf32>
    %5 = tpu.matmul %3, %4, %cst {dimension_numbers = #tpu.dot_dimension_numbers<[1], [0], [0], [1], [0, 0, 1, 1], [], []>} : vector<8x20xbf16>, vector<20x32xbf16>, vector<8x32xf32> -> vector<8x32xf32>
    %c0_5 = arith.constant 0 : index
    %c0_6 = arith.constant 0 : index
    %6 = vector.load %arg4[%c0_5, %c0_6] : memref<1x32xf32, #tpu.memory_space<vmem>>, vector<1x32xf32>
    %7 = vector.broadcast %6 : vector<1x32xf32> to vector<8x32xf32>
    %8 = arith.addf %5, %7 : vector<8x32xf32>
    %cst_7 = arith.constant 0.00999999977 : f32
    %9 = vector.broadcast %cst_7 : f32 to vector<8x32xf32>
    %10 = arith.mulf %9, %8 : vector<8x32xf32>
    %11 = arith.maximumf %8, %10 : vector<8x32xf32>
    %12 = arith.truncf %11 : vector<8x32xf32> to vector<8x32xbf16>
    %c0_8 = arith.constant 0 : index
    %c0_9 = arith.constant 0 : index
    %13 = vector.load %arg5[%c0_8, %c0_9] : memref<32x32xbf16, #tpu.memory_space<vmem>>, vector<32x32xbf16>
    %cst_10 = arith.constant dense<0.000000e+00> : vector<8x32xf32>
    %14 = tpu.matmul %12, %13, %cst_10 {dimension_numbers = #tpu.dot_dimension_numbers<[1], [0], [0], [1], [0, 0, 1, 1], [], []>} : vector<8x32xbf16>, vector<32x32xbf16>, vector<8x32xf32> -> vector<8x32xf32>
    %c0_11 = arith.constant 0 : index
    %c0_12 = arith.constant 0 : index
    %15 = vector.load %arg6[%c0_11, %c0_12] : memref<1x32xf32, #tpu.memory_space<vmem>>, vector<1x32xf32>
    %16 = vector.broadcast %15 : vector<1x32xf32> to vector<8x32xf32>
    %17 = arith.addf %14, %16 : vector<8x32xf32>
    %cst_13 = arith.constant 0.00999999977 : f32
    %18 = vector.broadcast %cst_13 : f32 to vector<8x32xf32>
    %19 = arith.mulf %18, %17 : vector<8x32xf32>
    %20 = arith.maximumf %17, %19 : vector<8x32xf32>
    %c0_14 = arith.constant 0 : index
    %c0_15 = arith.constant 0 : index
    %21 = vector.load %arg7[%c0_14, %c0_15] : memref<1x32xf32, #tpu.memory_space<vmem>>, vector<1x32xf32>
    %22 = vector.broadcast %21 : vector<1x32xf32> to vector<8x32xf32>
    %23 = arith.mulf %20, %22 : vector<8x32xf32>
    %cst_16 = arith.constant dense<0.000000e+00> : vector<8xf32>
    %24 = vector.multi_reduction <add>, %23, %cst_16 [1] : vector<8x32xf32> to vector<8xf32>
    %25 = vector.shape_cast %24 : vector<8xf32> to vector<8x1xf32>
    %26 = arith.mulf %20, %20 : vector<8x32xf32>
    %cst_17 = arith.constant dense<0.000000e+00> : vector<8xf32>
    %27 = vector.multi_reduction <add>, %26, %cst_17 [1] : vector<8x32xf32> to vector<8xf32>
    %28 = vector.shape_cast %27 : vector<8xf32> to vector<8x1xf32>
    %cst_18 = arith.constant 1.17549435E-38 : f32
    %29 = vector.broadcast %cst_18 : f32 to vector<8x1xf32>
    %30 = arith.maximumf %28, %29 : vector<8x1xf32>
    %31 = math.rsqrt %30 : vector<8x1xf32>
    %32 = arith.mulf %25, %31 : vector<8x1xf32>
    %c0_19 = arith.constant 0 : index
    %c0_20 = arith.constant 0 : index
    %33 = memref.load %arg8[%c0_19, %c0_20] : memref<1x1xf32, #tpu.memory_space<smem>>
    %34 = vector.broadcast %33 : f32 to vector<8x1xf32>
    %35 = arith.addf %32, %34 : vector<8x1xf32>
    %c0_21 = arith.constant 0 : index
    %c0_22 = arith.constant 0 : index
    %36 = vector.load %arg9[%c0_21, %c0_22] : memref<8x1xf32, #tpu.memory_space<vmem>>, vector<8x1xf32>
    tpu.vector_store %arg9[%c0_21, %c0_22], %35 {strides = array<i32>} : memref<8x1xf32, #tpu.memory_space<vmem>>, vector<8x1xf32>,
    return
  }
  func.func @transform_0(%arg0: i32) -> (i32, i32) {
    %c0_i32 = arith.constant 0 : i32
    %c0_i32_0 = arith.constant 0 : i32
    return %arg0, %c0_i32 : i32, i32
  }
  func.func @transform_1(%arg0: i32) -> (i32, i32) {
    %c0_i32 = arith.constant 0 : i32
    %c0_i32_0 = arith.constant 0 : i32
    return %arg0, %c0_i32 : i32, i32
  }
  func.func @transform_2(%arg0: i32) -> (i32, i32) {
    %c0_i32 = arith.constant 0 : i32
    %c0_i32_0 = arith.constant 0 : i32
    %c0_i32_1 = arith.constant 0 : i32
    return %c0_i32, %c0_i32_0 : i32, i32
  }
  func.func @transform_3(%arg0: i32) -> (i32, i32) {
    %c0_i32 = arith.constant 0 : i32
    %c0_i32_0 = arith.constant 0 : i32
    %c0_i32_1 = arith.constant 0 : i32
    return %c0_i32, %c0_i32_0 : i32, i32
  }
  func.func @transform_4(%arg0: i32) -> (i32, i32) {
    %c0_i32 = arith.constant 0 : i32
    %c0_i32_0 = arith.constant 0 : i32
    %c0_i32_1 = arith.constant 0 : i32
    return %c0_i32, %c0_i32_0 : i32, i32
  }
  func.func @transform_5(%arg0: i32) -> (i32, i32) {
    %c0_i32 = arith.constant 0 : i32
    %c0_i32_0 = arith.constant 0 : i32
    %c0_i32_1 = arith.constant 0 : i32
    return %c0_i32, %c0_i32_0 : i32, i32
  }
  func.func @transform_6(%arg0: i32) -> (i32, i32) {
    %c0_i32 = arith.constant 0 : i32
    %c0_i32_0 = arith.constant 0 : i32
    %c0_i32_1 = arith.constant 0 : i32
    return %c0_i32, %c0_i32_0 : i32, i32
  }
  func.func @transform_7(%arg0: i32) -> (i32, i32) {
    %c0_i32 = arith.constant 0 : i32
    %c0_i32_0 = arith.constant 0 : i32
    %c0_i32_1 = arith.constant 0 : i32
    return %c0_i32, %c0_i32_0 : i32, i32
  }
  func.func @transform_8(%arg0: i32) -> (i32, i32) {
    %c0_i32 = arith.constant 0 : i32
    %c0_i32_0 = arith.constant 0 : i32
    return %arg0, %c0_i32 : i32, i32
  }
}

</mosaic_0001>

<llo_original>
// kernel: tpu_custom_call.1
$region0: #{tpu_custom_call.1}
  #allocation0 [shape = 'u32[]', space=smem, size = 0x4, offset = 0x4, fixed_abs, tag = 'smem constant byte address 0x4 - core index']
  #allocation1 [shape = 'u32[144,128]{1,0:T(1,128)}', space=vmem, size = 0x12000, scoped, tag = 'internal scratch']
  #allocation2 [shape = 'f32[1,1]{1,0:T(1,128)S(6)}', space=smem, size = 0x200, scoped, tag = 'scoped memory for tpu_custom_call.1']
  %s0 = inlined_call_operand.hbm [shape: f32[8,16], index: 0, kind: input, shape index: {}]
  %s1 = inlined_call_operand.vmem [shape: f32[8,4], index: 1, kind: input, shape index: {}]
  %s2 = inlined_call_operand.vmem [shape: bf16[20,32], index: 2, kind: input, shape index: {}]
  %s3 = inlined_call_operand.vmem [shape: f32[1,32], index: 3, kind: input, shape index: {}]
  %s4 = inlined_call_operand.vmem [shape: bf16[32,32], index: 4, kind: input, shape index: {}]
  %s5 = inlined_call_operand.vmem [shape: f32[1,32], index: 5, kind: input, shape index: {}]
  %s6 = inlined_call_operand.vmem [shape: f32[1,32], index: 6, kind: input, shape index: {}]
  %s7 = inlined_call_operand.<no memory space> [shape: f32[1,1], index: 7, kind: input, shape index: {}]
  %s8 = inlined_call_operand.vmem [shape: f32[8,1], index: 8, kind: output, shape index: {}]
  %s9 = sld [smem:[#allocation0]]
  $region46: #{tpu_custom_call.1} parent=0
    _
  %s11 = ssub.s32 1, %s9
  %s12 = scalar_select 0, %s11, %s9
  %13 = sst [smem:[#allocation2]] %s7
  $region1: #{tpu_custom_call.1} parent=0
    #allocation3 [shape = 'u8[4096]{0}', space=vmem, size = 0x1000, scoped, tag = 'input window, operand 0, single buffered']
    #allocation4 [shape = 's32[1]{0}', space=sflag, size = 0x4, scoped, tag = 'scoped memory for tpu_custom_call.1']
    %14 = vsyncpa [#allocation4], 0
    // Predicated region
    $region2: #{tpu_custom_call.1} parent=1 // pred_check
      _
    $region3: #{tpu_custom_call.1} parent=1 // pred_check_branch
      %16 = sbr.rel (0) target = $region5
    $region4: #{tpu_custom_call.1} parent=1 // pred_region
      %s18 = ssub.s32 128, 128
      %19 = vsyncadd [#allocation4], %s18
      %s21 = sshll.u32 [#allocation3], 4
      %s22 = int_to_ptr.vmem [resolvable:$true] %s21
      %24 = dma.hbm_to_vmem [thread:$0]  %s0, 128, %s22, [#allocation4]
    $region5: #{tpu_custom_call.1} parent=1 // pred_fallthru
      _
    // Predicated region
    $region6: #{tpu_custom_call.1} parent=1 // pred_check
      _
    $region7: #{tpu_custom_call.1} parent=1 // pred_check_branch
      %26 = sbr.rel (0) target = $region9
    $region8: #{tpu_custom_call.1} parent=1 // pred_region
      _
    $region9: #{tpu_custom_call.1} parent=1 // pred_fallthru
      _
    // Predicated region
    $region10: #{tpu_custom_call.1} parent=1 // pred_check
      _
    $region11: #{tpu_custom_call.1} parent=1 // pred_check_branch
      %28 = sbr.rel (0) target = $region13
    $region12: #{tpu_custom_call.1} parent=1 // pred_region
      _
    $region13: #{tpu_custom_call.1} parent=1 // pred_fallthru
      _
    // Predicated region
    $region14: #{tpu_custom_call.1} parent=1 // pred_check
      _
    $region15: #{tpu_custom_call.1} parent=1 // pred_check_branch
      %30 = sbr.rel (0) target = $region17
    $region16: #{tpu_custom_call.1} parent=1 // pred_region
      _
    $region17: #{tpu_custom_call.1} parent=1 // pred_fallthru
      _
    // Predicated region
    $region18: #{tpu_custom_call.1} parent=1 // pred_check
      _
    $region19: #{tpu_custom_call.1} parent=1 // pred_check_branch
      %32 = sbr.rel (0) target = $region21
    $region20: #{tpu_custom_call.1} parent=1 // pred_region
      _
    $region21: #{tpu_custom_call.1} parent=1 // pred_fallthru
      _
    // Predicated region
    $region22: #{tpu_custom_call.1} parent=1 // pred_check
      _
    $region23: #{tpu_custom_call.1} parent=1 // pred_check_branch
      %34 = sbr.rel (0) target = $region25
    $region24: #{tpu_custom_call.1} parent=1 // pred_region
      _
    $region25: #{tpu_custom_call.1} parent=1 // pred_fallthru
      _
    // Predicated region
    $region26: #{tpu_custom_call.1} parent=1 // pred_check
      _
    $region27: #{tpu_custom_call.1} parent=1 // pred_check_branch
      %36 = sbr.rel (0) target = $region29
    $region28: #{tpu_custom_call.1} parent=1 // pred_region
      _
    $region29: #{tpu_custom_call.1} parent=1 // pred_fallthru
      _
    // Predicated region
    $region30: #{tpu_custom_call.1} parent=1 // pred_check
      _
    $region31: #{tpu_custom_call.1} parent=1 // pred_check_branch
      %38 = sbr.rel (0) target = $region33
    $region32: #{tpu_custom_call.1} parent=1 // pred_region
      _
    $region33: #{tpu_custom_call.1} parent=1 // pred_fallthru
      _
    // Predicated region
    $region34: #{tpu_custom_call.1} parent=1 // pred_check
      _
    $region35: #{tpu_custom_call.1} parent=1 // pred_check_branch
      %40 = sbr.rel (0) target = $region37
    $region36: #{tpu_custom_call.1} parent=1 // pred_region
      %41 = dma.done [#allocation4], 128
    $region37: #{tpu_custom_call.1} parent=1 // pred_fallthru
      _
    %v43 = vld [vmem:[#allocation3] sm:$0xff]
    %v44 = vld [vmem:[%s1] sm:$0xff]
    %46 = vrot.lane.b32.xlu0 %v44, 16
    %v47 = vpop.permute.xlu0 %46
    %vm49 = vcmask 130048
    %v50 = vsel %vm49, %v43, %v47
    %v51 = vpack.c.bf16 %v50, %v50
    %v52 = vld [vmem:[%s2] sm:$0xf]
    %v53 = vld [vmem:[%s2 + $0x4] sm:$0xf]
    %v54 = vld [vmem:[%s2 + $0x8] sm:$0x3]
    %v55 = vld [vmem:[%s3] sm:$0x1]
    %v57 = vlaneseq
    %v58 = vshrl.u32 %v57, 7
    %v59 = vsub.s32 0, %v58
    %v60 = vrot.slane %v55, %v59
    %v65 = vunpack.c.l.b16 %v52
    %v66 = vunpack.c.l.b16 %v53
    %v67 = vunpack.c.l.b16 %v54
    %v68 = vpack.c.b16 %v66, %v65
    %v69 = vpack.c.b16 %v67, %v67
    %vm71 = vcmask 162816
    %v73 = vsel %vm71, %v51, 0
    %vm75 = vcmask 1041408
    %v77 = vsel %vm75, %v69, 0
    %79 = vmatprep.subr.bf16.mxu0 0
    %80 = vmatpush1.bf16.msra.mxu0 %v68
    %81 = vmatprep.subr.bf16.mxu0 0
    %82 = vmatpush1.bf16.msra.mxu0 %v77
    %83 = vmatprep.subr.bf16.mxu0 0
    %84 = vmatpush1.bf16.msra.mxu0 0
    %85 = vmatprep.subr.bf16.mxu0 0
    %86 = vmatpush1.bf16.msra.mxu0 0
    %87 = vmatprep.subr.bf16.mxu0 0
    %88 = vmatpush1.bf16.msra.mxu0 0
    %89 = vmatprep.subr.bf16.mxu0 0
    %90 = vmatpush1.bf16.msra.mxu0 0
    %91 = vmatprep.subr.bf16.mxu0 0
    %92 = vmatpush1.bf16.msra.mxu0 0
    %93 = vmatprep.subr.bf16.mxu0 0
    %94 = vmatpush1.bf16.msra.mxu0 0
    %95 = vmatprep.subr.bf16.mxu0 0
    %96 = vmatpush1.bf16.msra.mxu0 0
    %97 = vmatprep.subr.bf16.mxu0 0
    %98 = vmatpush1.bf16.msra.mxu0 0
    %99 = vmatprep.subr.bf16.mxu0 0
    %100 = vmatpush1.bf16.msra.mxu0 0
    %101 = vmatprep.subr.bf16.mxu0 0
    %102 = vmatpush1.bf16.msra.mxu0 0
    %103 = vmatprep.subr.bf16.mxu0 0
    %104 = vmatpush1.bf16.msra.mxu0 0
    %105 = vmatprep.subr.bf16.mxu0 0
    %106 = vmatpush1.bf16.msra.mxu0 0
    %107 = vmatprep.subr.bf16.mxu0 0
    %108 = vmatpush1.bf16.msra.mxu0 0
    %109 = vmatprep.subr.bf16.mxu0 0
    %110 = vmatpush1.bf16.msra.mxu0 0
    %111 = vmatprep.mubr.bf16.mxu0 0
    %112 = vmatmul.mubr.bf16.gmra.mrb[0].mxu0 %v73
    %v113 = vpop.f32.mrb[0].mxu0
    %v114 = vadd.f32 %v60, %v113
    %v115 = vpop.f32.mrb[0].mxu0
    %v116 = vpop.f32.mrb[0].mxu0
    %v117 = vpop.f32.mrb[0].mxu0
    %118 = vdwg.mxu0
    %v119 = vmul.f32 %v114, 0.01
    %v120 = vmax.f32 %v114, %v119
    %v121 = vpack.c.bf16 %v120, %v120
    %v122 = vld [vmem:[%s4] sm:$0xf]
    %v123 = vld [vmem:[%s4 + $0x4] sm:$0xf]
    %v124 = vld [vmem:[%s4 + $0x8] sm:$0xf]
    %v125 = vld [vmem:[%s4 + $0xc] sm:$0xf]
    %v126 = vld [vmem:[%s5] sm:$0x1]
    %v128 = vlaneseq
    %v129 = vshrl.u32 %v128, 7
    %v130 = vsub.s32 0, %v129
    %v131 = vrot.slane %v126, %v130
    %v137 = vunpack.c.l.b16 %v122
    %v138 = vunpack.c.l.b16 %v123
    %v139 = vunpack.c.l.b16 %v124
    %v140 = vunpack.c.l.b16 %v125
    %v141 = vpack.c.b16 %v138, %v137
    %v142 = vpack.c.b16 %v140, %v139
    %vm145 = vcmask 261120
    %v147 = vsel %vm145, %v121, 0
    %149 = vmatprep.subr.bf16.mxu0 0
    %150 = vmatpush1.bf16.msra.mxu0 %v141
    %151 = vmatprep.subr.bf16.mxu0 0
    %152 = vmatpush1.bf16.msra.mxu0 %v142
    %153 = vmatprep.subr.bf16.mxu0 0
    %154 = vmatpush1.bf16.msra.mxu0 0
    %155 = vmatprep.subr.bf16.mxu0 0
    %156 = vmatpush1.bf16.msra.mxu0 0
    %157 = vmatprep.subr.bf16.mxu0 0
    %158 = vmatpush1.bf16.msra.mxu0 0
    %159 = vmatprep.subr.bf16.mxu0 0
    %160 = vmatpush1.bf16.msra.mxu0 0
    %161 = vmatprep.subr.bf16.mxu0 0
    %162 = vmatpush1.bf16.msra.mxu0 0
    %163 = vmatprep.subr.bf16.mxu0 0
    %164 = vmatpush1.bf16.msra.mxu0 0
    %165 = vmatprep.subr.bf16.mxu0 0
    %166 = vmatpush1.bf16.msra.mxu0 0
    %167 = vmatprep.subr.bf16.mxu0 0
    %168 = vmatpush1.bf16.msra.mxu0 0
    %169 = vmatprep.subr.bf16.mxu0 0
    %170 = vmatpush1.bf16.msra.mxu0 0
    %171 = vmatprep.subr.bf16.mxu0 0
    %172 = vmatpush1.bf16.msra.mxu0 0
    %173 = vmatprep.subr.bf16.mxu0 0
    %174 = vmatpush1.bf16.msra.mxu0 0
    %175 = vmatprep.subr.bf16.mxu0 0
    %176 = vmatpush1.bf16.msra.mxu0 0
    %177 = vmatprep.subr.bf16.mxu0 0
    %178 = vmatpush1.bf16.msra.mxu0 0
    %179 = vmatprep.subr.bf16.mxu0 0
    %180 = vmatpush1.bf16.msra.mxu0 0
    %181 = vmatprep.mubr.bf16.mxu0 0
    %182 = vmatmul.mubr.bf16.gmra.mrb[0].mxu0 %v147
    %v183 = vpop.f32.mrb[0].mxu0
    %v184 = vadd.f32 %v131, %v183
    %v185 = vpop.f32.mrb[0].mxu0
    %v186 = vpop.f32.mrb[0].mxu0
    %v187 = vpop.f32.mrb[0].mxu0
    %188 = vdwg.mxu0
    %v189 = vmul.f32 %v184, 0.01
    %v190 = vmax.f32 %v184, %v189
    %v191 = vld [vmem:[%s6] sm:$0x1]
    %v193 = vlaneseq
    %v194 = vshrl.u32 %v193, 7
    %v195 = vsub.s32 0, %v194
    %v196 = vrot.slane %v191, %v195
    %v198 = vmul.f32 %v190, %v196
    %v199 = vsel %vm145, %v198, 0.0
    %200 = vadd.xlane.f32.xlu0 %v199
    %v201 = vpop.xlane.xlu0 %200
    %v202 = vmul.f32 %v190, %v190
    %v203 = vsel %vm145, %v202, 0.0
    %204 = vadd.xlane.f32.xlu0 %v203
    %v205 = vpop.xlane.xlu0 %204
    %v206 = vmax.f32 %v205, 1.1754944e-38
    %v207 = vrsqrt.pop %v206
    %v208 = vmul.f32 %v201, %v207
    %s209 = sld [smem:[#allocation2]]
    %v210 = vstv %s209
    %v211 = vadd.f32 %v208, %v210
    %vm212 = vcmask 7168
    %213 = vst.msk [vmem:[%s8] sm:$0xff] %vm212, %v211
    // Predicated region
    $region38: #{tpu_custom_call.1} parent=1 // pred_check
      _
    $region39: #{tpu_custom_call.1} parent=1 // pred_check_branch
      %215 = sbr.rel (0) target = $region41
    $region40: #{tpu_custom_call.1} parent=1 // pred_region
      _
    $region41: #{tpu_custom_call.1} parent=1 // pred_fallthru
      _
    // Predicated region
    $region42: #{tpu_custom_call.1} parent=1 // pred_check
      _
    $region43: #{tpu_custom_call.1} parent=1 // pred_check_branch
      %217 = sbr.rel (0) target = $region45
    $region44: #{tpu_custom_call.1} parent=1 // pred_region
      _
    $region45: #{tpu_custom_call.1} parent=1 // pred_fallthru
      _
    %218 = vsyncpa [#allocation4], 1

</llo_original>
